<compile_context>
chip_gen: v6e
topology: v6e:2x2x1
jax: 0.10.0
libtpu: 0.0.40
codegen_flags: <defaults>
</compile_context>

<pallas_src>
import jax
import jax.numpy as jnp
from jax.experimental import pallas as pl
from jax.experimental.pallas import tpu as pltpu

_MIB = 1024 * 1024


def _cdiv(a, b):
    return -(-a // b)


def _round_up(x, m):
    return (x + m - 1) // m * m


def _vmem_capacity_bytes():
    """Physical per-TensorCore VMEM (128 MiB v5e/v6e, 64 MiB v7x).  Conservative
    fallback (64 MiB) if the query is unavailable."""
    try:
        info = pltpu.get_tpu_info()
        for name in ("vmem_capacity_bytes", "vmem_bytes", "vmem_size_bytes"):
            v = getattr(info, name, None)
            if v:
                return int(v)
    except Exception:
        pass
    return 64 * _MIB


def _make_lmhead_kernel(*, eps, cache_norm, mm_dtype):
    """Builds the fused kernel.  cache_norm is a trace-time (static) flag."""
    mm_dt = jnp.dtype(mm_dtype)

    def _norm(x_ref, g_ref):
        # RMSNorm math stays fp32 (v5e-safe: no bf16 VPU there).
        x = x_ref[...].astype(jnp.float32)
        var = jnp.mean(x * x, axis=-1, keepdims=True)
        xn = x * jax.lax.rsqrt(var + eps)
        return (xn * g_ref[...].astype(jnp.float32)).astype(mm_dt)

    def _logits(xn, w_ref, s_ref, b_ref, o_ref):
        w = w_ref[...]
        if w.dtype != mm_dt:
            # Weight-only quant path (int8 / fp8 in HBM): upcast in VMEM so the
            # HBM traffic is halved but the MXU still runs bf16 x bf16.
            w = w.astype(mm_dt)
        acc = jnp.dot(xn, w, preferred_element_type=jnp.float32)   # MXU, f32 acc
        acc = acc * s_ref[...] + b_ref[...]                        # dequant scale + bias (f32)
        o_ref[...] = acc.astype(o_ref.dtype)

    if cache_norm:
        # Normalized rows cached in VMEM scratch and reused across the vocab
        # sweep.  Only valid because the vocab axis is "arbitrary" (sequential
        # per core) -- enforced by the wrapper.
        def kernel(x_ref, g_ref, w_ref, s_ref, b_ref, o_ref, xn_ref):
            @pl.when(pl.program_id(1) == 0)
            def _():
                xn_ref[...] = _norm(x_ref, g_ref)
            _logits(xn_ref[...], w_ref, s_ref, b_ref, o_ref)
    else:
        # Recompute the cheap RMSNorm per vocab tile so BOTH axes can be
        # "parallel" (v7x megacore gets work even when M is tiny) and no VMEM
        # scratch is needed.
        def kernel(x_ref, g_ref, w_ref, s_ref, b_ref, o_ref):
            _logits(_norm(x_ref, g_ref), w_ref, s_ref, b_ref, o_ref)

    return kernel


def prepare_lmhead_params(norm_weight, lin_weight, lin_bias, *,
                          weight_dtype=jnp.bfloat16):
    """One-time parameter prep (NOT per forward call).

    Transposes the PyTorch (V, D) weight to the (D, V) MXU streaming layout and
    optionally quantizes it weight-only (per-column / per-vocab-token scales):
      * bfloat16 (default)            -- plain cast, unit scales.
      * int8   (v5e/v6e friendly)     -- symmetric per-column quant.
      * fp8    (e.g. jnp.float8_e4m3fn, v7x) -- per-column-scaled fp8 storage.
    Returns (g, w_t, col_scale, bias).
    """
    D = norm_weight.shape[0]
    w = jnp.asarray(lin_weight).astype(jnp.float32)                   # (V, D)
    V = w.shape[0]
    g = jnp.asarray(norm_weight).reshape(1, D).astype(jnp.float32)
    b = jnp.asarray(lin_bias).reshape(1, V).astype(jnp.float32)

    wdt = jnp.dtype(weight_dtype)
    if wdt in (jnp.dtype(jnp.bfloat16), jnp.dtype(jnp.float32)):
        w_t = w.T.astype(wdt)                                          # (D, V)
        s = jnp.ones((1, V), jnp.float32)
    else:
        col_max = jnp.maximum(jnp.max(jnp.abs(w), axis=1, keepdims=True), 1e-8)
        if wdt == jnp.dtype(jnp.int8):
            scale = col_max / 127.0
            w_q = jnp.clip(jnp.round(w / scale), -127.0, 127.0).astype(jnp.int8)
        else:  # fp8 family
            scale = col_max / float(jnp.finfo(wdt).max)
            w_q = (w / scale).astype(wdt)
        w_t = w_q.T                                                    # (D, V)
        s = scale.reshape(1, V).astype(jnp.float32)
    return g, w_t, s, b


def lmhead_forward(x, g2, w_t, s2, b2, *, eps=1e-6, out_dtype=jnp.bfloat16,
                   mm_dtype=jnp.bfloat16, tm=None, tn=None,
                   cache_norm=None, vmem_budget_bytes=None):
    """Fused LMHead forward: x (B, S, D) -> logits (B, S, V).

    g2/w_t/s2/b2 come from prepare_lmhead_params.  out_dtype defaults to
    bfloat16 (HBM writeback win); pass jnp.float32 for module-exact fp32 logits.
    """
    B, S, D = x.shape
    V = w_t.shape[1]
    M = B * S
    x2 = x.reshape(M, D)

    w_bytes = jnp.dtype(w_t.dtype).itemsize
    x_bytes = jnp.dtype(x.dtype).itemsize
    out_bytes = jnp.dtype(out_dtype).itemsize
    mm_bytes = jnp.dtype(mm_dtype).itemsize

    # ---- Generation-aware VMEM budget (v5e/v6e: 128 MiB, v7x: 64 MiB). ----
    vmem_cap = _vmem_capacity_bytes()
    budget = int(vmem_cap * 0.72) if vmem_budget_bytes is None else int(vmem_budget_bytes)

    # ---- Tile selection.  tm is the W^T-reuse knob (HBM traffic ~ ceil(M/tm) * D*V),
    # so grow it aggressively; tn only amortises per-step overhead. ----
    if tm is None:
        tm = (1024 if budget >= 80 * _MIB else 768) if M >= 4096 else 512
    if tn is None:
        tn = 2048 if budget >= 80 * _MIB else 1024

    tm_eff = min(tm, _round_up(M, 8))
    if tm_eff >= 256:
        tm_eff = max(256, (tm_eff // 256) * 256)        # 256-align for 2x256x256 MXU
    tn_eff = min(_round_up(tn, 128), _round_up(V, 128))
    if tn_eff > 256:
        tn_eff = max(256, (tn_eff // 256) * 256)

    def working_set(tm_b, tn_b):
        return (2 * D * tn_b * w_bytes                  # W^T slab (double-buffered, dominant)
                + 2 * tm_b * tn_b * out_bytes           # output tile (double-buffered)
                + 2 * tm_b * D * x_bytes                # x tile (double-buffered)
                + 4 * tn_b * 4                          # scale + bias slabs
                + tm_b * D * (4 + mm_bytes)             # f32 norm intermediate + bf16 xn
                + tm_b * tn_b * 4)                      # f32 accumulator intermediate

    # Shrink tn first (does not change HBM traffic), then tm, until it fits.
    while working_set(tm_eff, tn_eff) > budget and tn_eff > 256:
        tn_eff -= 256
    while working_set(tm_eff, tn_eff) > budget and tn_eff > 128:
        tn_eff -= 128
    while working_set(tm_eff, tn_eff) > budget and tm_eff > 256:
        tm_eff -= 256

    grid_m = _cdiv(M, tm_eff)
    grid_n = _cdiv(V, tn_eff)

    # Megacore: with >=2 row blocks, cache the normalized rows and sweep vocab
    # sequentially; with a single row block (small M / decode), recompute the
    # norm per vocab tile so the vocab axis can also be split across cores.
    if cache_norm is None:
        cache_norm = grid_m >= 2

    # Leave headroom below physical VMEM for Mosaic internal scratch.
    vmem_limit = int(min(vmem_cap * 0.85,
                         max(32 * _MIB, working_set(tm_eff, tn_eff) * 1.25)))

    kernel = _make_lmhead_kernel(eps=eps, cache_norm=cache_norm, mm_dtype=mm_dtype)
    scratch_shapes = [pltpu.VMEM((tm_eff, D), mm_dtype)] if cache_norm else []
    dim_sem = ("parallel", "arbitrary") if cache_norm else ("parallel", "parallel")

    cost = pl.CostEstimate(
        flops=2 * M * D * V,
        transcendentals=M * (1 if cache_norm else grid_n),
        bytes_accessed=int(grid_m * D * V * w_bytes + M * D * x_bytes
                           + M * V * out_bytes + 2 * V * 4 + D * 4))

    out = pl.pallas_call(
        kernel,
        out_shape=jax.ShapeDtypeStruct((M, V), out_dtype),
        grid_spec=pltpu.PrefetchScalarGridSpec(
            num_scalar_prefetch=0,
            grid=(grid_m, grid_n),
            in_specs=[
                pl.BlockSpec((tm_eff, D), lambda i, j: (i, 0)),    # x rows (full D)
                pl.BlockSpec((1, D), lambda i, j: (0, 0)),         # RMSNorm weight
                pl.BlockSpec((D, tn_eff), lambda i, j: (0, j)),    # W^T column slab
                pl.BlockSpec((1, tn_eff), lambda i, j: (0, j)),    # per-column dequant scale
                pl.BlockSpec((1, tn_eff), lambda i, j: (0, j)),    # bias slab
            ],
            out_specs=pl.BlockSpec((tm_eff, tn_eff), lambda i, j: (i, j)),
            scratch_shapes=scratch_shapes),
        compiler_params=pltpu.CompilerParams(
            dimension_semantics=dim_sem,
            vmem_limit_bytes=vmem_limit),
        cost_estimate=cost,
    )(x2, g2, w_t, s2, b2)

    return out.reshape(B, S, V)


def lmhead_ref(x, norm_weight, lin_weight, lin_bias, eps=1e-6,
               matmul_dtype=jnp.bfloat16):
    """Reference matching the kernel's numerics: fp32 RMSNorm, bf16 MXU matmul,
    fp32 accumulate + bias (logits returned in fp32)."""
    B, S, D = x.shape
    xf = x.astype(jnp.float32)
    var = jnp.mean(xf * xf, axis=-1, keepdims=True)
    xn = (xf * jax.lax.rsqrt(var + eps) * norm_weight).astype(matmul_dtype)
    wt = lin_weight.T.astype(matmul_dtype)
    out = jnp.dot(xn.reshape(-1, D), wt, preferred_element_type=jnp.float32)
    out = out + lin_bias.astype(jnp.float32)
    return out.reshape(B, S, -1)


if __name__ == "__main__":
    # Small shapes consistent with the module: dim=128, num_tokens=256,
    # batch=2, seq=8, use_bias=True (lmhead weight tied to the embedding).
    B, S, D, V = 2, 8, 128, 256
    key = jax.random.PRNGKey(0)
    kx, kw, kb = jax.random.split(key, 3)

    x = jax.random.normal(kx, (B, S, D), dtype=jnp.float32)
    norm_weight = jnp.ones((D,), dtype=jnp.float32)                   # RMSNorm init
    lin_weight = jax.random.normal(kw, (V, D), dtype=jnp.float32) * 0.02
    lin_bias = jax.random.normal(kb, (V,), dtype=jnp.float32) * 0.02

    ref = lmhead_ref(x, norm_weight, lin_weight, lin_bias)

    # 1) Default path: bf16 weights, bf16 logits, auto tiles (recompute-norm,
    #    both grid axes "parallel" since this tiny M has a single row block).
    g2, w_t, s2, b2 = prepare_lmhead_params(norm_weight, lin_weight, lin_bias)
    out = lmhead_forward(x, g2, w_t, s2, b2)
    out = jax.block_until_ready(out)
    assert out.shape == (B, S, V) and out.dtype == jnp.bfloat16
    assert jnp.allclose(out.astype(jnp.float32), ref, atol=2e-2, rtol=2e-2), \
        "bf16-logit path mismatch vs reference"

    # 2) Forced small tiles: exercises the VMEM-cached-norm path (grid_M >= 2,
    #    vocab axis "arbitrary") and module-exact fp32 logits.
    out2 = lmhead_forward(x, g2, w_t, s2, b2, out_dtype=jnp.float32, tm=8, tn=128)
    out2 = jax.block_until_ready(out2)
    assert jnp.allclose(out2, ref, atol=5e-3, rtol=5e-3), \
        "cached-norm path mismatch vs reference"

    # 3) int8 weight-only path (halves W^T HBM traffic; per-column dequant
    #    applied after the f32 accumulate inside the kernel).
    g8, w8, s8, b8 = prepare_lmhead_params(norm_weight, lin_weight, lin_bias,
                                           weight_dtype=jnp.int8)
    out3 = lmhead_forward(x, g8, w8, s8, b8, out_dtype=jnp.float32)
    out3 = jax.block_until_ready(out3)
    assert jnp.allclose(out3, ref, atol=5e-2, rtol=5e-2), \
        "int8 weight-only path mismatch vs reference"

    print("KERNEL_OK")
</pallas_src>

<mosaic_0001>
module attributes {stable_mosaic.version = 11 : i64} {
  func.func @kernel(%arg0: i32, %arg1: i32, %arg2: memref<16x128xf32, #tpu.memory_space<vmem>>, %arg3: memref<1x128xf32, #tpu.memory_space<vmem>>, %arg4: memref<128x256xbf16, #tpu.memory_space<vmem>>, %arg5: memref<1x256xf32, #tpu.memory_space<vmem>>, %arg6: memref<1x256xf32, #tpu.memory_space<vmem>>, %arg7: memref<16x256xbf16, #tpu.memory_space<vmem>>) attributes {dimension_semantics = [#tpu.dimension_semantics<parallel>, #tpu.dimension_semantics<parallel>], iteration_bounds = array<i64: 1, 1>, scalar_prefetch = 0 : i64, scratch_operands = 0 : i64, tpu.core_type = #tpu.core_type<tc>, window_params = [{transform_indices = @transform_0, window_bounds = array<i64: 16, 128>}, {pipeline_mode = #tpu.pipeline_mode<synchronous>, transform_indices = @transform_1, window_bounds = array<i64: 1, 128>}, {transform_indices = @transform_2, window_bounds = array<i64: 128, 256>}, {transform_indices = @transform_3, window_bounds = array<i64: 1, 256>}, {transform_indices = @transform_4, window_bounds = array<i64: 1, 256>}, {transform_indices = @transform_5, window_bounds = array<i64: 16, 256>}]} {
    %c0 = arith.constant 0 : index
    %c0_0 = arith.constant 0 : index
    %0 = vector.load %arg2[%c0, %c0_0] : memref<16x128xf32, #tpu.memory_space<vmem>>, vector<16x128xf32>
    %1 = arith.mulf %0, %0 : vector<16x128xf32>
    %cst = arith.constant dense<0.000000e+00> : vector<16xf32>
    %2 = vector.multi_reduction <add>, %1, %cst [1] : vector<16x128xf32> to vector<16xf32>
    %3 = vector.shape_cast %2 : vector<16xf32> to vector<16x1xf32>
    %cst_1 = arith.constant 1.280000e+02 : f32
    %4 = vector.broadcast %cst_1 : f32 to vector<16x1xf32>
    %5 = arith.divf %3, %4 : vector<16x1xf32>
    %cst_2 = arith.constant 9.99999997E-7 : f32
    %6 = vector.broadcast %cst_2 : f32 to vector<16x1xf32>
    %7 = arith.addf %5, %6 : vector<16x1xf32>
    %8 = math.rsqrt %7 : vector<16x1xf32>
    %9 = vector.broadcast %8 : vector<16x1xf32> to vector<16x128xf32>
    %10 = arith.mulf %0, %9 : vector<16x128xf32>
    %c0_3 = arith.constant 0 : index
    %c0_4 = arith.constant 0 : index
    %11 = vector.load %arg3[%c0_3, %c0_4] : memref<1x128xf32, #tpu.memory_space<vmem>>, vector<1x128xf32>
    %12 = vector.broadcast %11 : vector<1x128xf32> to vector<16x128xf32>
    %13 = arith.mulf %10, %12 : vector<16x128xf32>
    %14 = arith.truncf %13 : vector<16x128xf32> to vector<16x128xbf16>
    %c0_5 = arith.constant 0 : index
    %c0_6 = arith.constant 0 : index
    %15 = vector.load %arg4[%c0_5, %c0_6] : memref<128x256xbf16, #tpu.memory_space<vmem>>, vector<128x256xbf16>
    %cst_7 = arith.constant dense<0.000000e+00> : vector<16x256xf32>
    %16 = tpu.matmul %14, %15, %cst_7 {dimension_numbers = #tpu.dot_dimension_numbers<[1], [0], [0], [1], [0, 0, 1, 1], [], []>} : vector<16x128xbf16>, vector<128x256xbf16>, vector<16x256xf32> -> vector<16x256xf32>
    %c0_8 = arith.constant 0 : index
    %c0_9 = arith.constant 0 : index
    %17 = vector.load %arg5[%c0_8, %c0_9] : memref<1x256xf32, #tpu.memory_space<vmem>>, vector<1x256xf32>
    %18 = vector.broadcast %17 : vector<1x256xf32> to vector<16x256xf32>
    %19 = arith.mulf %16, %18 : vector<16x256xf32>
    %c0_10 = arith.constant 0 : index
    %c0_11 = arith.constant 0 : index
    %20 = vector.load %arg6[%c0_10, %c0_11] : memref<1x256xf32, #tpu.memory_space<vmem>>, vector<1x256xf32>
    %21 = vector.broadcast %20 : vector<1x256xf32> to vector<16x256xf32>
    %22 = arith.addf %19, %21 : vector<16x256xf32>
    %23 = arith.truncf %22 : vector<16x256xf32> to vector<16x256xbf16>
    %c0_12 = arith.constant 0 : index
    %c0_13 = arith.constant 0 : index
    %24 = vector.load %arg7[%c0_12, %c0_13] : memref<16x256xbf16, #tpu.memory_space<vmem>>, vector<16x256xbf16>
    tpu.vector_store %arg7[%c0_12, %c0_13], %23 {strides = array<i32>} : memref<16x256xbf16, #tpu.memory_space<vmem>>, vector<16x256xbf16>,
    return
  }
  func.func @transform_0(%arg0: i32, %arg1: i32) -> (i32, i32) {
    %c0_i32 = arith.constant 0 : i32
    %c0_i32_0 = arith.constant 0 : i32
    return %arg0, %c0_i32 : i32, i32
  }
  func.func @transform_1(%arg0: i32, %arg1: i32) -> (i32, i32) {
    %c0_i32 = arith.constant 0 : i32
    %c0_i32_0 = arith.constant 0 : i32
    %c0_i32_1 = arith.constant 0 : i32
    return %c0_i32, %c0_i32_0 : i32, i32
  }
  func.func @transform_2(%arg0: i32, %arg1: i32) -> (i32, i32) {
    %c0_i32 = arith.constant 0 : i32
    %c0_i32_0 = arith.constant 0 : i32
    return %c0_i32, %arg1 : i32, i32
  }
  func.func @transform_3(%arg0: i32, %arg1: i32) -> (i32, i32) {
    %c0_i32 = arith.constant 0 : i32
    %c0_i32_0 = arith.constant 0 : i32
    return %c0_i32, %arg1 : i32, i32
  }
  func.func @transform_4(%arg0: i32, %arg1: i32) -> (i32, i32) {
    %c0_i32 = arith.constant 0 : i32
    %c0_i32_0 = arith.constant 0 : i32
    return %c0_i32, %arg1 : i32, i32
  }
  func.func @transform_5(%arg0: i32, %arg1: i32) -> (i32, i32) {
    %c0_i32 = arith.constant 0 : i32
    return %arg0, %arg1 : i32, i32
  }
}

</mosaic_0001>

<llo_original>
// kernel: tpu_custom_call.1
$region0: #{tpu_custom_call.1}
  #allocation0 [shape = 'u32[]', space=smem, size = 0x4, offset = 0x4, fixed_abs, tag = 'smem constant byte address 0x4 - core index']
  #allocation1 [shape = 'u32[144,128]{1,0:T(1,128)}', space=vmem, size = 0x12000, scoped, tag = 'internal scratch']
  %s0 = inlined_call_operand.hbm [shape: f32[16,128], index: 0, kind: input, shape index: {}]
  %s1 = inlined_call_operand.vmem [shape: f32[1,128], index: 1, kind: input, shape index: {}]
  %s2 = inlined_call_operand.hbm [shape: bf16[128,256], index: 2, kind: input, shape index: {}]
  %s3 = inlined_call_operand.vmem [shape: f32[1,256], index: 3, kind: input, shape index: {}]
  %s4 = inlined_call_operand.vmem [shape: f32[1,256], index: 4, kind: input, shape index: {}]
  %s5 = inlined_call_operand.hbm [shape: bf16[16,256], index: 5, kind: output, shape index: {}]
  %s6 = sld [smem:[#allocation0]]
  $region38: #{tpu_custom_call.1} parent=0
    _
  %s8 = ssub.s32 1, %s6
  %s9 = scalar_select 0, %s8, %s6
  $region1: #{tpu_custom_call.1} parent=0
    #allocation2 [shape = 'u8[8192]{0}', space=vmem, size = 0x2000, scoped, tag = 'input window, operand 0, single buffered']
    #allocation3 [shape = 's32[1]{0}', space=sflag, size = 0x4, scoped, tag = 'scoped memory for tpu_custom_call.1']
    #allocation4 [shape = 's32[1]{0}', space=sflag, size = 0x4, scoped, tag = 'scoped memory for tpu_custom_call.1']
    #allocation5 [shape = 'u8[65536]{0}', space=vmem, size = 0x10000, scoped, tag = 'input window, operand 2, single buffered']
    #allocation6 [shape = 's32[1]{0}', space=sflag, size = 0x4, scoped, tag = 'scoped memory for tpu_custom_call.1']
    #allocation7 [shape = 'u8[8192]{0}', space=vmem, size = 0x2000, scoped, tag = 'output window, operand 0, single buffered']
    %10 = vsyncpa [#allocation3], 0
    %11 = vsyncpa [#allocation6], 0
    %12 = vsyncpa [#allocation4], 0
    // Predicated region
    $region2: #{tpu_custom_call.1} parent=1 // pred_check
      _
    $region3: #{tpu_custom_call.1} parent=1 // pred_check_branch
      %14 = sbr.rel (0) target = $region5
    $region4: #{tpu_custom_call.1} parent=1 // pred_region
      %s16 = ssub.s32 256, 256
      %17 = vsyncadd [#allocation3], %s16
      %s18 = sshll.u32 [#allocation2], 4
      %s19 = int_to_ptr.vmem [resolvable:$true] %s18
      %24 = dma.hbm_to_vmem [thread:$0]  %s0, 256, %s19, [#allocation3], 128, 128, 8
    $region5: #{tpu_custom_call.1} parent=1 // pred_fallthru
      _
    // Predicated region
    $region6: #{tpu_custom_call.1} parent=1 // pred_check
      _
    $region7: #{tpu_custom_call.1} parent=1 // pred_check_branch
      %26 = sbr.rel (0) target = $region9
    $region8: #{tpu_custom_call.1} parent=1 // pred_region
      _
    $region9: #{tpu_custom_call.1} parent=1 // pred_fallthru
      _
    // Predicated region
    $region10: #{tpu_custom_call.1} parent=1 // pred_check
      _
    $region11: #{tpu_custom_call.1} parent=1 // pred_check_branch
      %28 = sbr.rel (0) target = $region13
    $region12: #{tpu_custom_call.1} parent=1 // pred_region
      %s30 = ssub.s32 2048, 2048
      %31 = vsyncadd [#allocation6], %s30
      %s32 = sshll.u32 [#allocation5], 4
      %s33 = int_to_ptr.vmem [resolvable:$true] %s32
      %38 = dma.hbm_to_vmem [thread:$0]  %s2, 2048, %s33, [#allocation6], 128, 128, 8
    $region13: #{tpu_custom_call.1} parent=1 // pred_fallthru
      _
    // Predicated region
    $region14: #{tpu_custom_call.1} parent=1 // pred_check
      _
    $region15: #{tpu_custom_call.1} parent=1 // pred_check_branch
      %40 = sbr.rel (0) target = $region17
    $region16: #{tpu_custom_call.1} parent=1 // pred_region
      _
    $region17: #{tpu_custom_call.1} parent=1 // pred_fallthru
      _
    // Predicated region
    $region18: #{tpu_custom_call.1} parent=1 // pred_check
      _
    $region19: #{tpu_custom_call.1} parent=1 // pred_check_branch
      %42 = sbr.rel (0) target = $region21
    $region20: #{tpu_custom_call.1} parent=1 // pred_region
      _
    $region21: #{tpu_custom_call.1} parent=1 // pred_fallthru
      _
    // Predicated region
    $region22: #{tpu_custom_call.1} parent=1 // pred_check
      _
    $region23: #{tpu_custom_call.1} parent=1 // pred_check_branch
      %44 = sbr.rel (0) target = $region25
    $region24: #{tpu_custom_call.1} parent=1 // pred_region
      %45 = dma.done [#allocation3], 256
    $region25: #{tpu_custom_call.1} parent=1 // pred_fallthru
      _
    // Predicated region
    $region26: #{tpu_custom_call.1} parent=1 // pred_check
      _
    $region27: #{tpu_custom_call.1} parent=1 // pred_check_branch
      %47 = sbr.rel (0) target = $region29
    $region28: #{tpu_custom_call.1} parent=1 // pred_region
      %48 = dma.done [#allocation6], 2048
    $region29: #{tpu_custom_call.1} parent=1 // pred_fallthru
      _
    %v50 = vld [vmem:[#allocation2] sm:$0xff]
    %v51 = vld [vmem:[#allocation2 + $0x8] sm:$0xff]
    %v52 = vmul.f32 %v50, %v50
    %v53 = vmul.f32 %v51, %v51
    %54 = vadd.xlane.f32.xlu0 %v52
    %v55 = vpop.xlane.xlu0 %54
    %56 = vadd.xlane.f32.xlu0 %v53
    %v57 = vpop.xlane.xlu0 %56
    %v58 = vrcp.pop 128.0
    %v59 = vmul.f32 %v55, %v58
    %v60 = vmul.f32 %v57, %v58
    %v61 = vadd.f32 %v59, 1e-06
    %v62 = vadd.f32 %v60, 1e-06
    %v63 = vrsqrt.pop %v61
    %v64 = vrsqrt.pop %v62
    %v65 = vmul.f32 %v50, %v63
    %v66 = vmul.f32 %v51, %v64
    %v67 = vld [vmem:[%s1] sm:$0x1]
    %v69 = vlaneseq
    %v70 = vshrl.u32 %v69, 7
    %v71 = vsub.s32 0, %v70
    %v72 = vrot.slane %v67, %v71
    %v74 = vmul.f32 %v65, %v72
    %v75 = vmul.f32 %v66, %v72
    %v76 = vpack.c.bf16 %v75, %v74
    %v77 = vld [vmem:[#allocation5] sm:$0xff]
    %v78 = vld [vmem:[#allocation5 + $0x8] sm:$0xff]
    %v79 = vld [vmem:[#allocation5 + $0x10] sm:$0xff]
    %v80 = vld [vmem:[#allocation5 + $0x18] sm:$0xff]
    %v81 = vld [vmem:[#allocation5 + $0x20] sm:$0xff]
    %v82 = vld [vmem:[#allocation5 + $0x28] sm:$0xff]
    %v83 = vld [vmem:[#allocation5 + $0x30] sm:$0xff]
    %v84 = vld [vmem:[#allocation5 + $0x38] sm:$0xff]
    %v85 = vld [vmem:[#allocation5 + $0x40] sm:$0xff]
    %v86 = vld [vmem:[#allocation5 + $0x48] sm:$0xff]
    %v87 = vld [vmem:[#allocation5 + $0x50] sm:$0xff]
    %v88 = vld [vmem:[#allocation5 + $0x58] sm:$0xff]
    %v89 = vld [vmem:[#allocation5 + $0x60] sm:$0xff]
    %v90 = vld [vmem:[#allocation5 + $0x68] sm:$0xff]
    %v91 = vld [vmem:[#allocation5 + $0x70] sm:$0xff]
    %v92 = vld [vmem:[#allocation5 + $0x78] sm:$0xff]
    %v109 = vunpack.c.l.b16 %v77
    %v110 = vunpack.c.h.b16 %v77
    %v111 = vunpack.c.l.b16 %v78
    %v112 = vunpack.c.h.b16 %v78
    %v113 = vunpack.c.l.b16 %v79
    %v114 = vunpack.c.h.b16 %v79
    %v115 = vunpack.c.l.b16 %v80
    %v116 = vunpack.c.h.b16 %v80
    %v117 = vunpack.c.l.b16 %v81
    %v118 = vunpack.c.h.b16 %v81
    %v119 = vunpack.c.l.b16 %v82
    %v120 = vunpack.c.h.b16 %v82
    %v121 = vunpack.c.l.b16 %v83
    %v122 = vunpack.c.h.b16 %v83
    %v123 = vunpack.c.l.b16 %v84
    %v124 = vunpack.c.h.b16 %v84
    %v125 = vunpack.c.l.b16 %v85
    %v126 = vunpack.c.h.b16 %v85
    %v127 = vunpack.c.l.b16 %v86
    %v128 = vunpack.c.h.b16 %v86
    %v129 = vunpack.c.l.b16 %v87
    %v130 = vunpack.c.h.b16 %v87
    %v131 = vunpack.c.l.b16 %v88
    %v132 = vunpack.c.h.b16 %v88
    %v133 = vunpack.c.l.b16 %v89
    %v134 = vunpack.c.h.b16 %v89
    %v135 = vunpack.c.l.b16 %v90
    %v136 = vunpack.c.h.b16 %v90
    %v137 = vunpack.c.l.b16 %v91
    %v138 = vunpack.c.h.b16 %v91
    %v139 = vunpack.c.l.b16 %v92
    %v140 = vunpack.c.h.b16 %v92
    %v141 = vpack.c.b16 %v111, %v109
    %v142 = vpack.c.b16 %v112, %v110
    %v143 = vpack.c.b16 %v115, %v113
    %v144 = vpack.c.b16 %v116, %v114
    %v145 = vpack.c.b16 %v119, %v117
    %v146 = vpack.c.b16 %v120, %v118
    %v147 = vpack.c.b16 %v123, %v121
    %v148 = vpack.c.b16 %v124, %v122
    %v149 = vpack.c.b16 %v127, %v125
    %v150 = vpack.c.b16 %v128, %v126
    %v151 = vpack.c.b16 %v131, %v129
    %v152 = vpack.c.b16 %v132, %v130
    %v153 = vpack.c.b16 %v135, %v133
    %v154 = vpack.c.b16 %v136, %v134
    %v155 = vpack.c.b16 %v139, %v137
    %v156 = vpack.c.b16 %v140, %v138
    %173 = vmatprep.subr.bf16.mxu0 %v156
    %174 = vmatpush1.bf16.msra.mxu0 %v155
    %175 = vmatprep.subr.bf16.mxu0 %v154
    %176 = vmatpush1.bf16.msra.mxu0 %v153
    %177 = vmatprep.subr.bf16.mxu0 %v152
    %178 = vmatpush1.bf16.msra.mxu0 %v151
    %179 = vmatprep.subr.bf16.mxu0 %v150
    %180 = vmatpush1.bf16.msra.mxu0 %v149
    %181 = vmatprep.subr.bf16.mxu0 %v148
    %182 = vmatpush1.bf16.msra.mxu0 %v147
    %183 = vmatprep.subr.bf16.mxu0 %v146
    %184 = vmatpush1.bf16.msra.mxu0 %v145
    %185 = vmatprep.subr.bf16.mxu0 %v144
    %186 = vmatpush1.bf16.msra.mxu0 %v143
    %187 = vmatprep.subr.bf16.mxu0 %v142
    %188 = vmatpush1.bf16.msra.mxu0 %v141
    %189 = vmatprep.subr.bf16.mxu0 0
    %190 = vmatpush2.bf16.msra.mxu0 0
    %191 = vmatprep.subr.bf16.mxu0 0
    %192 = vmatpush2.bf16.msra.mxu0 0
    %193 = vmatprep.subr.bf16.mxu0 0
    %194 = vmatpush2.bf16.msra.mxu0 0
    %195 = vmatprep.subr.bf16.mxu0 0
    %196 = vmatpush2.bf16.msra.mxu0 0
    %197 = vmatprep.subr.bf16.mxu0 0
    %198 = vmatpush2.bf16.msra.mxu0 0
    %199 = vmatprep.subr.bf16.mxu0 0
    %200 = vmatpush2.bf16.msra.mxu0 0
    %201 = vmatprep.subr.bf16.mxu0 0
    %202 = vmatpush2.bf16.msra.mxu0 0
    %203 = vmatprep.subr.bf16.mxu0 0
    %204 = vmatpush2.bf16.msra.mxu0 0
    %205 = vmatprep.mubr.bf16.mxu0 0
    %206 = vmatmul.mubr.bf16.gmra.mxu0 %v76
    %v207 = vpop.f32.mrf.mxu0
    %v208 = vadd.f32 0.0, %v207
    %v209 = vpop.f32.mrf.mxu0
    %v210 = vadd.f32 0.0, %v209
    %v211 = vpop.f32.mrf.mxu0
    %v212 = vadd.f32 0.0, %v211
    %v213 = vpop.f32.mrf.mxu0
    %v214 = vadd.f32 0.0, %v213
    %215 = vdwg.mxu0
    %v216 = vld [vmem:[%s3] sm:$0x3]
    %v218 = vlaneseq
    %v219 = vshrl.u32 %v218, 7
    %v220 = vsub.s32 0, %v219
    %v221 = vrot.slane %v216, %v220
    %v222 = vlaneseq
    %v223 = vshrl.u32 %v222, 7
    %v224 = vsub.s32 1, %v223
    %v225 = vrot.slane %v216, %v224
    %v228 = vmul.f32 %v208, %v221
    %v229 = vmul.f32 %v210, %v225
    %v230 = vmul.f32 %v212, %v221
    %v231 = vmul.f32 %v214, %v225
    %v232 = vld [vmem:[%s4] sm:$0x3]
    %v234 = vlaneseq
    %v235 = vshrl.u32 %v234, 7
    %v236 = vsub.s32 0, %v235
    %v237 = vrot.slane %v232, %v236
    %v238 = vlaneseq
    %v239 = vshrl.u32 %v238, 7
    %v240 = vsub.s32 1, %v239
    %v241 = vrot.slane %v232, %v240
    %v244 = vadd.f32 %v228, %v237
    %v245 = vadd.f32 %v229, %v241
    %v246 = vadd.f32 %v230, %v237
    %v247 = vadd.f32 %v231, %v241
    %v248 = vpack.c.bf16 %v246, %v244
    %v249 = vpack.c.bf16 %v247, %v245
    %v252 = vunpack.c.l.b16 %v248
    %v253 = vunpack.c.l.b16 %v249
    %v254 = vunpack.c.h.b16 %v248
    %v255 = vunpack.c.h.b16 %v249
    %v256 = vpack.c.b16 %v253, %v252
    %v257 = vpack.c.b16 %v255, %v254
    %260 = vst [vmem:[#allocation7] sm:$0xff] %v256
    %261 = vst [vmem:[#allocation7 + $0x8] sm:$0xff] %v257
    // Predicated region
    $region30: #{tpu_custom_call.1} parent=1 // pred_check
      _
    $region31: #{tpu_custom_call.1} parent=1 // pred_check_branch
      %263 = sbr.rel (0) target = $region33
    $region32: #{tpu_custom_call.1} parent=1 // pred_region
      %s265 = ssub.s32 256, 256
      %266 = vsyncadd [#allocation4], %s265
      %s267 = sshll.u32 [#allocation7], 4
      %s268 = int_to_ptr.vmem [resolvable:$true] %s267
      %273 = dma.vmem_to_hbm [thread:$0]  %s268, 256, %s5, [#allocation4], 128, 128, 8
    $region33: #{tpu_custom_call.1} parent=1 // pred_fallthru
      _
    // Predicated region
    $region34: #{tpu_custom_call.1} parent=1 // pred_check
      _
    $region35: #{tpu_custom_call.1} parent=1 // pred_check_branch
      %275 = sbr.rel (0) target = $region37
    $region36: #{tpu_custom_call.1} parent=1 // pred_region
      %276 = dma.done [#allocation4], 256
    $region37: #{tpu_custom_call.1} parent=1 // pred_fallthru
      _
    %277 = vsyncpa [#allocation3], 1
    %278 = vsyncpa [#allocation6], 1
    %279 = vsyncpa [#allocation4], 1

</llo_original>
